<compile_context>
chip_gen: v5e
topology: v5e:2x2
jax: 0.10.0
libtpu: 0.0.40
codegen_flags: <defaults>
</compile_context>

<pallas_src>
import functools

import numpy as np
import jax
import jax.numpy as jnp
from jax.experimental import pallas as pl
from jax.experimental.pallas import tpu as pltpu


def _round_up(x, m):
    return (x + m - 1) // m * m


def _default_epilogue_dtype(compute_dtype):
    """bf16 epilogue only where the VPU supports bf16 (v6e / v7x)."""
    if jnp.dtype(compute_dtype) != jnp.dtype(jnp.bfloat16):
        return jnp.float32
    try:
        kind = jax.devices()[0].device_kind.lower()
    except Exception:
        kind = ""
    if ("v6" in kind) or ("v7" in kind):
        return jnp.bfloat16
    return jnp.float32           # v5e (no bf16 VPU) / unknown: keep f32 path


def _critic_kernel(state_ref, action_ref, w1_ref, b1_ref, w2_ref, b2_ref,
                   w3_ref, b3_ref, o_ref, xcat_ref, *, ep_dtype):
    # state_ref: (tb, S)      action_ref: (tb, A)
    # w1_ref:    (S+A, H1)    b1_ref:     (1, H1)   [ep_dtype]
    # w2_ref:    (H1, H2)     b2_ref:     (1, H2)   [ep_dtype]
    # w3_ref:    (1, H2) f32  b3_ref:     (1, 1) f32 scalar in SMEM
    # o_ref:     (tb, 1) f32  xcat_ref:   (tb, S+A) f32 VMEM scratch
    cdt = w1_ref.dtype                      # MXU operand dtype (f32 or bf16)
    S = state_ref.shape[1]

    # Fused torch.cat: build the (tb, S+A) fc1 operand in VMEM so fc1 is a
    # single MXU push instead of two (K=S and K=A) plus an extra vector add.
    xcat_ref[:, :S] = state_ref[...].astype(jnp.float32)
    xcat_ref[:, S:] = action_ref[...].astype(jnp.float32)

    # fc1: one K=S+A matmul, f32 accumulation on the MXU.
    h1 = jnp.dot(xcat_ref[...].astype(cdt), w1_ref[...],
                 preferred_element_type=jnp.float32)
    h1 = jnp.maximum(h1.astype(ep_dtype) + b1_ref[...], 0)     # bias + ReLU

    # fc2
    h2 = jnp.dot(h1.astype(cdt), w2_ref[...],
                 preferred_element_type=jnp.float32)
    h2 = jnp.maximum(h2.astype(ep_dtype) + b2_ref[...], 0)

    # fc3 (out_features == 1): VPU multiply + XLU lane reduction in f32,
    # bias added from an SMEM scalar.  Avoids a lane-width-1 MXU matmul.
    q = jnp.sum(h2.astype(jnp.float32) * w3_ref[...],
                axis=-1, keepdims=True) + b3_ref[0, 0]
    o_ref[...] = q.astype(o_ref.dtype)


def critic_forward(state, action, params, *, tile_b=1024, num_cores_hint=2,
                   activation_dtype=None, epilogue_dtype=None):
    """Fused Critic MLP forward: (B, S), (B, A) -> (B, 1) float32."""
    w1, b1, w2, b2, w3, b3 = params
    B, S = state.shape
    A = action.shape[1]
    SA, H1 = w1.shape
    H2 = w2.shape[1]
    assert SA == S + A, "w1 must have shape (state_size + action_size, fc1_units)"

    cdt = w1.dtype
    if epilogue_dtype is None:
        epilogue_dtype = _default_epilogue_dtype(cdt)

    # Optional bf16 activation streaming (halves the dominant HBM stream).
    if activation_dtype is not None:
        state = state.astype(activation_dtype)
        action = action.astype(activation_dtype)

    # Trace-time parameter reshuffles (free).
    b1_k = b1.reshape(1, H1).astype(epilogue_dtype)
    b2_k = b2.reshape(1, H2).astype(epilogue_dtype)
    w3_row = w3.reshape(1, H2).astype(jnp.float32)
    b3_s = b3.reshape(1, 1).astype(jnp.float32)

    # ---- batch tile selection ------------------------------------------
    # Big tiles amortize per-grid-step overhead; cap so the "parallel" axis
    # still has >= num_cores_hint steps (v7x: 2 TensorCores per chip).
    if B <= 8:
        tb = B
    else:
        tb = min(int(tile_b), _round_up(pl.cdiv(B, max(1, num_cores_hint)), 8))
        tb = max(8, (tb // 8) * 8)
    grid = (pl.cdiv(B, tb),)

    def act_spec(f):                      # streamed activation tiles
        return pl.BlockSpec((tb, f), lambda i: (i, 0))

    def res_spec(r, c):                   # weights/biases resident across grid
        return pl.BlockSpec((r, c), lambda i: (0, 0))

    itemsize = lambda x: jnp.dtype(x.dtype).itemsize
    flops = 2 * B * ((S + A) * H1 + H1 * H2 + H2)
    bytes_accessed = (B * S * itemsize(state) + B * A * itemsize(action)
                      + w1.size * itemsize(w1) + w2.size * itemsize(w2)
                      + b1_k.size * itemsize(b1_k) + b2_k.size * itemsize(b2_k)
                      + (H2 + 1) * 4
                      + B * 4)

    kernel = functools.partial(_critic_kernel, ep_dtype=epilogue_dtype)

    return pl.pallas_call(
        kernel,
        out_shape=jax.ShapeDtypeStruct((B, 1), jnp.float32),
        grid=grid,
        in_specs=[
            act_spec(S),                 # state
            act_spec(A),                 # action
            res_spec(S + A, H1),         # w1
            res_spec(1, H1),             # b1 (epilogue dtype)
            res_spec(H1, H2),            # w2
            res_spec(1, H2),             # b2 (epilogue dtype)
            res_spec(1, H2),             # w3 row (f32)
            pl.BlockSpec(memory_space=pltpu.MemorySpace.SMEM),  # b3 scalar
        ],
        out_specs=pl.BlockSpec((tb, 1), lambda i: (i, 0)),
        scratch_shapes=[pltpu.VMEM((tb, S + A), jnp.float32)],  # fused concat
        compiler_params=pltpu.CompilerParams(
            dimension_semantics=("parallel",),   # v7x: shard batch over 2 TCs
        ),
        cost_estimate=pl.CostEstimate(flops=flops, transcendentals=0,
                                      bytes_accessed=bytes_accessed),
    )(state, action, w1, b1_k, w2, b2_k, w3_row, b3_s)


def init_critic_params(key, state_size, action_size, fc1_units=256, fc2_units=128,
                       param_dtype=jnp.float32):
    """Init mirroring the module's __init__ (custom uniform limits for the
    weights, default PyTorch Linear bias init).  w1/w2 may be stored bf16 for
    the MXU fast path; biases and w3 (VPU path) stay f32."""
    in_dim = state_size + action_size
    k = jax.random.split(key, 6)

    limit1 = 1.0 / np.sqrt(in_dim * fc1_units)
    limit2 = 1.0 / np.sqrt(fc1_units * fc2_units)
    limit3 = 0.003

    # weights stored as (in, out) = transpose of torch's (out, in)
    w1 = jax.random.uniform(k[0], (in_dim, fc1_units), jnp.float32,
                            -limit1, limit1).astype(param_dtype)
    w2 = jax.random.uniform(k[1], (fc1_units, fc2_units), jnp.float32,
                            -limit2, limit2).astype(param_dtype)
    w3 = jax.random.uniform(k[2], (fc2_units, 1), jnp.float32, -limit3, limit3)

    # torch.nn.Linear default bias init: U(-1/sqrt(fan_in), 1/sqrt(fan_in))
    bl1 = 1.0 / np.sqrt(in_dim)
    bl2 = 1.0 / np.sqrt(fc1_units)
    bl3 = 1.0 / np.sqrt(fc2_units)
    b1 = jax.random.uniform(k[3], (1, fc1_units), jnp.float32, -bl1, bl1)
    b2 = jax.random.uniform(k[4], (1, fc2_units), jnp.float32, -bl2, bl2)
    b3 = jax.random.uniform(k[5], (1, 1), jnp.float32, -bl3, bl3)

    return (w1, b1, w2, b2, w3, b3)


def critic_reference(state, action, params):
    """Plain-JAX reference with the same matmul dtype discipline as the kernel."""
    w1, b1, w2, b2, w3, b3 = params
    x = jnp.concatenate([state, action], axis=1)
    h1 = jnp.maximum(
        jnp.dot(x.astype(w1.dtype), w1, preferred_element_type=jnp.float32) + b1, 0.0)
    h2 = jnp.maximum(
        jnp.dot(h1.astype(w2.dtype), w2, preferred_element_type=jnp.float32) + b2, 0.0)
    return jnp.dot(h2, w3, preferred_element_type=jnp.float32) + b3


if __name__ == "__main__":
    STATE, ACTION = 16, 4
    key = jax.random.PRNGKey(0)
    k_s, k_a, k_p = jax.random.split(key, 3)

    params_f32 = init_critic_params(k_p, STATE, ACTION, 256, 128,
                                    param_dtype=jnp.float32)

    # 1) small batch (single tile), f32: strict check vs plain-JAX reference.
    B = 8
    state = jax.random.normal(k_s, (B, STATE), jnp.float32)
    action = jax.random.normal(k_a, (B, ACTION), jnp.float32)
    q = jax.block_until_ready(critic_forward(state, action, params_f32))
    q_ref = critic_reference(state, action, params_f32)
    np.testing.assert_allclose(np.asarray(q), np.asarray(q_ref),
                               rtol=1e-5, atol=1e-5)
    assert q.shape == (B, 1)

    # 2) multi-tile grid with a partial final batch tile (B % tile != 0), f32.
    B2 = 200
    state2 = jax.random.normal(k_s, (B2, STATE), jnp.float32)
    action2 = jax.random.normal(k_a, (B2, ACTION), jnp.float32)
    q2_ref = critic_reference(state2, action2, params_f32)

    q2a = jax.block_until_ready(critic_forward(state2, action2, params_f32))
    np.testing.assert_allclose(np.asarray(q2a), np.asarray(q2_ref),
                               rtol=1e-5, atol=1e-5)

    q2b = jax.block_until_ready(
        critic_forward(state2, action2, params_f32, tile_b=64))
    np.testing.assert_allclose(np.asarray(q2b), np.asarray(q2_ref),
                               rtol=1e-5, atol=1e-5)

    # 3) bf16 weights + bf16 activation streaming (f32 MXU accumulation);
    #    looser tolerance for bf16 rounding.
    params_bf16 = init_critic_params(k_p, STATE, ACTION, 256, 128,
                                     param_dtype=jnp.bfloat16)
    q16 = jax.block_until_ready(
        critic_forward(state2, action2, params_bf16,
                       activation_dtype=jnp.bfloat16))
    q16_ref = critic_reference(state2.astype(jnp.bfloat16),
                               action2.astype(jnp.bfloat16), params_bf16)
    np.testing.assert_allclose(np.asarray(q16), np.asarray(q16_ref),
                               rtol=5e-2, atol=5e-2)

    print("KERNEL_OK")
</pallas_src>

<mosaic_0001>
module attributes {stable_mosaic.version = 11 : i64} {
  func.func @_critic_kernel(%arg0: i32, %arg1: memref<8x16xf32, #tpu.memory_space<vmem>>, %arg2: memref<8x4xf32, #tpu.memory_space<vmem>>, %arg3: memref<20x256xf32, #tpu.memory_space<vmem>>, %arg4: memref<1x256xf32, #tpu.memory_space<vmem>>, %arg5: memref<256x128xf32, #tpu.memory_space<vmem>>, %arg6: memref<1x128xf32, #tpu.memory_space<vmem>>, %arg7: memref<1x128xf32, #tpu.memory_space<vmem>>, %arg8: memref<1x1xf32, #tpu.memory_space<smem>>, %arg9: memref<8x1xf32, #tpu.memory_space<vmem>>, %arg10: memref<8x20xf32, #tpu.memory_space<vmem>>) attributes {dimension_semantics = [#tpu.dimension_semantics<parallel>], iteration_bounds = array<i64: 1>, scalar_prefetch = 0 : i64, scratch_operands = 1 : i64, tpu.core_type = #tpu.core_type<tc>, window_params = [{transform_indices = @transform_0, window_bounds = array<i64: 8, 16>}, {transform_indices = @transform_1, window_bounds = array<i64: 8, 4>}, {pipeline_mode = #tpu.pipeline_mode<synchronous>, transform_indices = @transform_2, window_bounds = array<i64: 20, 256>}, {pipeline_mode = #tpu.pipeline_mode<synchronous>, transform_indices = @transform_3, window_bounds = array<i64: 1, 256>}, {pipeline_mode = #tpu.pipeline_mode<synchronous>, transform_indices = @transform_4, window_bounds = array<i64: 256, 128>}, {pipeline_mode = #tpu.pipeline_mode<synchronous>, transform_indices = @transform_5, window_bounds = array<i64: 1, 128>}, {pipeline_mode = #tpu.pipeline_mode<synchronous>, transform_indices = @transform_6, window_bounds = array<i64: 1, 128>}, {transform_indices = @transform_7, window_bounds = array<i64: 1, 1>}, {transform_indices = @transform_8, window_bounds = array<i64: 8, 1>}]} {
    %c0 = arith.constant 0 : index
    %c0_0 = arith.constant 0 : index
    %0 = vector.load %arg1[%c0, %c0_0] : memref<8x16xf32, #tpu.memory_space<vmem>>, vector<8x16xf32>
    %c0_1 = arith.constant 0 : index
    %c0_2 = arith.constant 0 : index
    %1 = vector.load %arg10[%c0_1, %c0_2] : memref<8x20xf32, #tpu.memory_space<vmem>>, vector<8x16xf32>
    tpu.vector_store %arg10[%c0_1, %c0_2], %0 {strides = array<i32>} : memref<8x20xf32, #tpu.memory_space<vmem>>, vector<8x16xf32>,
    %c0_3 = arith.constant 0 : index
    %c0_4 = arith.constant 0 : index
    %2 = vector.load %arg2[%c0_3, %c0_4] : memref<8x4xf32, #tpu.memory_space<vmem>>, vector<8x4xf32>
    %c0_5 = arith.constant 0 : index
    %c16 = arith.constant 16 : index
    %3 = vector.load %arg10[%c0_5, %c16] : memref<8x20xf32, #tpu.memory_space<vmem>>, vector<8x4xf32>
    tpu.vector_store %arg10[%c0_5, %c16], %2 {strides = array<i32>} : memref<8x20xf32, #tpu.memory_space<vmem>>, vector<8x4xf32>,
    %c0_6 = arith.constant 0 : index
    %c0_7 = arith.constant 0 : index
    %4 = vector.load %arg10[%c0_6, %c0_7] : memref<8x20xf32, #tpu.memory_space<vmem>>, vector<8x20xf32>
    %c0_8 = arith.constant 0 : index
    %c0_9 = arith.constant 0 : index
    %5 = vector.load %arg3[%c0_8, %c0_9] : memref<20x256xf32, #tpu.memory_space<vmem>>, vector<20x256xf32>
    %cst = arith.constant dense<0.000000e+00> : vector<8x256xf32>
    %6 = tpu.matmul %4, %5, %cst {dimension_numbers = #tpu.dot_dimension_numbers<[1], [0], [0], [1], [0, 0, 1, 1], [], []>} : vector<8x20xf32>, vector<20x256xf32>, vector<8x256xf32> -> vector<8x256xf32>
    %c0_10 = arith.constant 0 : index
    %c0_11 = arith.constant 0 : index
    %7 = vector.load %arg4[%c0_10, %c0_11] : memref<1x256xf32, #tpu.memory_space<vmem>>, vector<1x256xf32>
    %8 = vector.broadcast %7 : vector<1x256xf32> to vector<8x256xf32>
    %9 = arith.addf %6, %8 : vector<8x256xf32>
    %cst_12 = arith.constant 0.000000e+00 : f32
    %10 = vector.broadcast %cst_12 : f32 to vector<8x256xf32>
    %11 = arith.maximumf %9, %10 : vector<8x256xf32>
    %c0_13 = arith.constant 0 : index
    %c0_14 = arith.constant 0 : index
    %12 = vector.load %arg5[%c0_13, %c0_14] : memref<256x128xf32, #tpu.memory_space<vmem>>, vector<256x128xf32>
    %cst_15 = arith.constant dense<0.000000e+00> : vector<8x128xf32>
    %13 = tpu.matmul %11, %12, %cst_15 {dimension_numbers = #tpu.dot_dimension_numbers<[1], [0], [0], [1], [0, 0, 1, 1], [], []>} : vector<8x256xf32>, vector<256x128xf32>, vector<8x128xf32> -> vector<8x128xf32>
    %c0_16 = arith.constant 0 : index
    %c0_17 = arith.constant 0 : index
    %14 = vector.load %arg6[%c0_16, %c0_17] : memref<1x128xf32, #tpu.memory_space<vmem>>, vector<1x128xf32>
    %15 = vector.broadcast %14 : vector<1x128xf32> to vector<8x128xf32>
    %16 = arith.addf %13, %15 : vector<8x128xf32>
    %cst_18 = arith.constant 0.000000e+00 : f32
    %17 = vector.broadcast %cst_18 : f32 to vector<8x128xf32>
    %18 = arith.maximumf %16, %17 : vector<8x128xf32>
    %c0_19 = arith.constant 0 : index
    %c0_20 = arith.constant 0 : index
    %19 = vector.load %arg7[%c0_19, %c0_20] : memref<1x128xf32, #tpu.memory_space<vmem>>, vector<1x128xf32>
    %20 = vector.broadcast %19 : vector<1x128xf32> to vector<8x128xf32>
    %21 = arith.mulf %18, %20 : vector<8x128xf32>
    %cst_21 = arith.constant dense<0.000000e+00> : vector<8xf32>
    %22 = vector.multi_reduction <add>, %21, %cst_21 [1] : vector<8x128xf32> to vector<8xf32>
    %23 = vector.shape_cast %22 : vector<8xf32> to vector<8x1xf32>
    %c0_22 = arith.constant 0 : index
    %c0_23 = arith.constant 0 : index
    %24 = memref.load %arg8[%c0_22, %c0_23] : memref<1x1xf32, #tpu.memory_space<smem>>
    %25 = vector.broadcast %24 : f32 to vector<8x1xf32>
    %26 = arith.addf %23, %25 : vector<8x1xf32>
    %c0_24 = arith.constant 0 : index
    %c0_25 = arith.constant 0 : index
    %27 = vector.load %arg9[%c0_24, %c0_25] : memref<8x1xf32, #tpu.memory_space<vmem>>, vector<8x1xf32>
    tpu.vector_store %arg9[%c0_24, %c0_25], %26 {strides = array<i32>} : memref<8x1xf32, #tpu.memory_space<vmem>>, vector<8x1xf32>,
    return
  }
  func.func @transform_0(%arg0: i32) -> (i32, i32) {
    %c0_i32 = arith.constant 0 : i32
    %c0_i32_0 = arith.constant 0 : i32
    return %arg0, %c0_i32 : i32, i32
  }
  func.func @transform_1(%arg0: i32) -> (i32, i32) {
    %c0_i32 = arith.constant 0 : i32
    %c0_i32_0 = arith.constant 0 : i32
    return %arg0, %c0_i32 : i32, i32
  }
  func.func @transform_2(%arg0: i32) -> (i32, i32) {
    %c0_i32 = arith.constant 0 : i32
    %c0_i32_0 = arith.constant 0 : i32
    %c0_i32_1 = arith.constant 0 : i32
    return %c0_i32, %c0_i32_0 : i32, i32
  }
  func.func @transform_3(%arg0: i32) -> (i32, i32) {
    %c0_i32 = arith.constant 0 : i32
    %c0_i32_0 = arith.constant 0 : i32
    %c0_i32_1 = arith.constant 0 : i32
    return %c0_i32, %c0_i32_0 : i32, i32
  }
  func.func @transform_4(%arg0: i32) -> (i32, i32) {
    %c0_i32 = arith.constant 0 : i32
    %c0_i32_0 = arith.constant 0 : i32
    %c0_i32_1 = arith.constant 0 : i32
    return %c0_i32, %c0_i32_0 : i32, i32
  }
  func.func @transform_5(%arg0: i32) -> (i32, i32) {
    %c0_i32 = arith.constant 0 : i32
    %c0_i32_0 = arith.constant 0 : i32
    %c0_i32_1 = arith.constant 0 : i32
    return %c0_i32, %c0_i32_0 : i32, i32
  }
  func.func @transform_6(%arg0: i32) -> (i32, i32) {
    %c0_i32 = arith.constant 0 : i32
    %c0_i32_0 = arith.constant 0 : i32
    %c0_i32_1 = arith.constant 0 : i32
    return %c0_i32, %c0_i32_0 : i32, i32
  }
  func.func @transform_7(%arg0: i32) -> (i32, i32) {
    %c0_i32 = arith.constant 0 : i32
    %c0_i32_0 = arith.constant 0 : i32
    %c0_i32_1 = arith.constant 0 : i32
    return %c0_i32, %c0_i32_0 : i32, i32
  }
  func.func @transform_8(%arg0: i32) -> (i32, i32) {
    %c0_i32 = arith.constant 0 : i32
    %c0_i32_0 = arith.constant 0 : i32
    return %arg0, %c0_i32 : i32, i32
  }
}

</mosaic_0001>

<llo_original>
// kernel: tpu_custom_call.1
$region0: #{tpu_custom_call.1}
  #allocation0 [shape = 'u32[]', space=smem, size = 0x4, offset = 0x4, fixed_abs, tag = 'smem constant byte address 0x4 - core index']
  #allocation1 [shape = 'u32[72,128]{1,0:T(1,128)}', space=vmem, size = 0x9000, scoped, tag = 'internal scratch']
  #allocation2 [shape = 'f32[8,20]{1,0:T(8,128)}', space=vmem, size = 0x1000, scoped, tag = 'scratch operand']
  #allocation3 [shape = 'f32[1,1]{1,0:T(1,128)S(6)}', space=smem, size = 0x200, scoped, tag = 'scoped memory for tpu_custom_call.1']
  %s0 = inlined_call_operand.vmem [shape: f32[8,16], index: 0, kind: input, shape index: {}]
  %s1 = inlined_call_operand.vmem [shape: f32[8,4], index: 1, kind: input, shape index: {}]
  %s2 = inlined_call_operand.hbm [shape: f32[20,256], index: 2, kind: input, shape index: {}]
  %s3 = inlined_call_operand.vmem [shape: f32[1,256], index: 3, kind: input, shape index: {}]
  %s4 = inlined_call_operand.hbm [shape: f32[256,128], index: 4, kind: input, shape index: {}]
  %s5 = inlined_call_operand.vmem [shape: f32[1,128], index: 5, kind: input, shape index: {}]
  %s6 = inlined_call_operand.vmem [shape: f32[1,128], index: 6, kind: input, shape index: {}]
  %s7 = inlined_call_operand.<no memory space> [shape: f32[1,1], index: 7, kind: input, shape index: {}]
  %s8 = inlined_call_operand.vmem [shape: f32[8,1], index: 8, kind: output, shape index: {}]
  %s9 = sld [smem:[#allocation0]]
  $region50: #{tpu_custom_call.1} parent=0
    _
  %s11 = ssub.s32 1, %s9
  %s12 = scalar_select 0, %s11, %s9
  %13 = sst [smem:[#allocation3]] %s7
  $region1: #{tpu_custom_call.1} parent=0
    #allocation4 [shape = 'u8[24576]{0}', space=vmem, size = 0x6000, scoped, tag = 'input window, operand 2, single buffered']
    #allocation5 [shape = 's32[1]{0}', space=sflag, size = 0x4, scoped, tag = 'scoped memory for tpu_custom_call.1']
    #allocation6 [shape = 'u8[131072]{0}', space=vmem, size = 0x20000, scoped, tag = 'input window, operand 4, single buffered']
    #allocation7 [shape = 's32[1]{0}', space=sflag, size = 0x4, scoped, tag = 'scoped memory for tpu_custom_call.1']
    %14 = vsyncpa [#allocation5], 0
    %15 = vsyncpa [#allocation7], 0
    // Predicated region
    $region2: #{tpu_custom_call.1} parent=1 // pred_check
      _
    $region3: #{tpu_custom_call.1} parent=1 // pred_check_branch
      %17 = sbr.rel (0) target = $region5
    $region4: #{tpu_custom_call.1} parent=1 // pred_region
      _
    $region5: #{tpu_custom_call.1} parent=1 // pred_fallthru
      _
    // Predicated region
    $region6: #{tpu_custom_call.1} parent=1 // pred_check
      _
    $region7: #{tpu_custom_call.1} parent=1 // pred_check_branch
      %19 = sbr.rel (0) target = $region9
    $region8: #{tpu_custom_call.1} parent=1 // pred_region
      _
    $region9: #{tpu_custom_call.1} parent=1 // pred_fallthru
      _
    // Predicated region
    $region10: #{tpu_custom_call.1} parent=1 // pred_check
      _
    $region11: #{tpu_custom_call.1} parent=1 // pred_check_branch
      %21 = sbr.rel (0) target = $region13
    $region12: #{tpu_custom_call.1} parent=1 // pred_region
      %23 = vsyncadd [#allocation5], 0
      %s24 = sshll.u32 %s2, 4
      %s25 = int_to_ptr.hbm [resolvable:$true] %s24
      %s26 = sshll.u32 [#allocation4], 4
      %s27 = int_to_ptr.vmem [resolvable:$true] %s26
      %32 = dma.hbm_to_vmem [thread:$0]  %s25, 768, %s27, [#allocation5], 256, 256, 16
    $region13: #{tpu_custom_call.1} parent=1 // pred_fallthru
      _
    // Predicated region
    $region14: #{tpu_custom_call.1} parent=1 // pred_check
      _
    $region15: #{tpu_custom_call.1} parent=1 // pred_check_branch
      %34 = sbr.rel (0) target = $region17
    $region16: #{tpu_custom_call.1} parent=1 // pred_region
      _
    $region17: #{tpu_custom_call.1} parent=1 // pred_fallthru
      _
    // Predicated region
    $region18: #{tpu_custom_call.1} parent=1 // pred_check
      _
    $region19: #{tpu_custom_call.1} parent=1 // pred_check_branch
      %36 = sbr.rel (0) target = $region21
    $region20: #{tpu_custom_call.1} parent=1 // pred_region
      %38 = vsyncadd [#allocation7], 0
      %s39 = sshll.u32 %s4, 4
      %s40 = int_to_ptr.hbm [resolvable:$true] %s39
      %s41 = sshll.u32 [#allocation6], 4
      %s42 = int_to_ptr.vmem [resolvable:$true] %s41
      %47 = dma.hbm_to_vmem [thread:$0]  %s40, 4096, %s42, [#allocation7], 128, 128, 8
    $region21: #{tpu_custom_call.1} parent=1 // pred_fallthru
      _
    // Predicated region
    $region22: #{tpu_custom_call.1} parent=1 // pred_check
      _
    $region23: #{tpu_custom_call.1} parent=1 // pred_check_branch
      %49 = sbr.rel (0) target = $region25
    $region24: #{tpu_custom_call.1} parent=1 // pred_region
      _
    $region25: #{tpu_custom_call.1} parent=1 // pred_fallthru
      _
    // Predicated region
    $region26: #{tpu_custom_call.1} parent=1 // pred_check
      _
    $region27: #{tpu_custom_call.1} parent=1 // pred_check_branch
      %51 = sbr.rel (0) target = $region29
    $region28: #{tpu_custom_call.1} parent=1 // pred_region
      _
    $region29: #{tpu_custom_call.1} parent=1 // pred_fallthru
      _
    // Predicated region
    $region30: #{tpu_custom_call.1} parent=1 // pred_check
      _
    $region31: #{tpu_custom_call.1} parent=1 // pred_check_branch
      %53 = sbr.rel (0) target = $region33
    $region32: #{tpu_custom_call.1} parent=1 // pred_region
      _
    $region33: #{tpu_custom_call.1} parent=1 // pred_fallthru
      _
    // Predicated region
    $region34: #{tpu_custom_call.1} parent=1 // pred_check
      _
    $region35: #{tpu_custom_call.1} parent=1 // pred_check_branch
      %55 = sbr.rel (0) target = $region37
    $region36: #{tpu_custom_call.1} parent=1 // pred_region
      %57 = dma.done [#allocation5], 768
    $region37: #{tpu_custom_call.1} parent=1 // pred_fallthru
      _
    // Predicated region
    $region38: #{tpu_custom_call.1} parent=1 // pred_check
      _
    $region39: #{tpu_custom_call.1} parent=1 // pred_check_branch
      %59 = sbr.rel (0) target = $region41
    $region40: #{tpu_custom_call.1} parent=1 // pred_region
      %61 = dma.done [#allocation7], 4096
    $region41: #{tpu_custom_call.1} parent=1 // pred_fallthru
      _
    %v62 = vld [vmem:[%s0] sm:$0xff]
    %vm63 = vcmask 130048
    %64 = vst.msk [vmem:[#allocation2] sm:$0xff] %vm63, %v62
    %v65 = vld [vmem:[%s1] sm:$0xff]
    %67 = vrot.lane.b32.xlu0 %v65, 16
    %v68 = vpop.permute.xlu0 %67
    %vm70 = vcmask 162944
    %71 = vst.msk [vmem:[#allocation2] sm:$0xff] %vm70, %v68
    %v72 = vld [vmem:[#allocation2] sm:$0xff]
    %v73 = vld [vmem:[#allocation4] sm:$0xff]
    %v74 = vld [vmem:[#allocation4 + $0x8] sm:$0xff]
    %v75 = vld [vmem:[#allocation4 + $0x10] sm:$0xff]
    %v76 = vld [vmem:[#allocation4 + $0x18] sm:$0xff]
    %v77 = vld [vmem:[#allocation4 + $0x20] sm:$0xf]
    %v78 = vld [vmem:[#allocation4 + $0x28] sm:$0xf]
    %v79 = vld [vmem:[%s3] sm:$0x3]
    %v81 = vperm.slane %v79, 0
    %v82 = vperm.slane %v79, 1
    %vm85 = vcmask 162816
    %v87 = vsel %vm85, %v72, 0
    %vm89 = vcmask 1043456
    %v91 = vsel %vm89, %v77, 0
    %v94 = vsel %vm89, %v78, 0
    %96 = vmatpush.msra.mxu0 0.0
    %97 = vmatpush.msra.mxu0 0.0
    %98 = vmatpush.msra.mxu0 0.0
    %99 = vmatpush.msra.mxu0 0.0
    %100 = vmatpush.msra.mxu0 0.0
    %101 = vmatpush.msra.mxu0 0.0
    %102 = vmatpush.msra.mxu0 0.0
    %103 = vmatpush.msra.mxu0 0.0
    %104 = vmatpush.msra.mxu0 0.0
    %105 = vmatpush.msra.mxu0 0.0
    %106 = vmatpush.msra.mxu0 0.0
    %107 = vmatpush.msra.mxu0 0.0
    %108 = vmatpush.msra.mxu0 0.0
    %109 = vmatpush.msra.mxu0 %v91
    %110 = vmatpush.msra.mxu0 %v75
    %111 = vmatpush.msra.mxu0 %v73
    %112 = vmatmul.f32.gmra.mxu0 %v87
    %v113 = vpop.f32.mrf.mxu0
    %v114 = vadd.f32 %v81, %v113
    %115 = vdwg.mxu0
    %116 = vmatpush.msra.mxu0 0.0
    %117 = vmatpush.msra.mxu0 0.0
    %118 = vmatpush.msra.mxu0 0.0
    %119 = vmatpush.msra.mxu0 0.0
    %120 = vmatpush.msra.mxu0 0.0
    %121 = vmatpush.msra.mxu0 0.0
    %122 = vmatpush.msra.mxu0 0.0
    %123 = vmatpush.msra.mxu0 0.0
    %124 = vmatpush.msra.mxu0 0.0
    %125 = vmatpush.msra.mxu0 0.0
    %126 = vmatpush.msra.mxu0 0.0
    %127 = vmatpush.msra.mxu0 0.0
    %128 = vmatpush.msra.mxu0 0.0
    %129 = vmatpush.msra.mxu0 %v94
    %130 = vmatpush.msra.mxu0 %v76
    %131 = vmatpush.msra.mxu0 %v74
    %132 = vmatmul.f32.gmra.mxu0 %v87
    %v133 = vpop.f32.mrf.mxu0
    %v134 = vadd.f32 %v82, %v133
    %135 = vdwg.mxu0
    %v136 = vmax.f32 %v114, 0.0
    %v137 = vmax.f32 %v134, 0.0
    %v138 = vld [vmem:[#allocation6] sm:$0xff]
    %v139 = vld [vmem:[#allocation6 + $0x8] sm:$0xff]
    %v140 = vld [vmem:[#allocation6 + $0x10] sm:$0xff]
    %v141 = vld [vmem:[#allocation6 + $0x18] sm:$0xff]
    %v142 = vld [vmem:[#allocation6 + $0x20] sm:$0xff]
    %v143 = vld [vmem:[#allocation6 + $0x28] sm:$0xff]
    %v144 = vld [vmem:[#allocation6 + $0x30] sm:$0xff]
    %v145 = vld [vmem:[#allocation6 + $0x38] sm:$0xff]
    %v146 = vld [vmem:[#allocation6 + $0x40] sm:$0xff]
    %v147 = vld [vmem:[#allocation6 + $0x48] sm:$0xff]
    %v148 = vld [vmem:[#allocation6 + $0x50] sm:$0xff]
    %v149 = vld [vmem:[#allocation6 + $0x58] sm:$0xff]
    %v150 = vld [vmem:[#allocation6 + $0x60] sm:$0xff]
    %v151 = vld [vmem:[#allocation6 + $0x68] sm:$0xff]
    %v152 = vld [vmem:[#allocation6 + $0x70] sm:$0xff]
    %v153 = vld [vmem:[#allocation6 + $0x78] sm:$0xff]
    %v154 = vld [vmem:[#allocation6 + $0x80] sm:$0xff]
    %v155 = vld [vmem:[#allocation6 + $0x88] sm:$0xff]
    %v156 = vld [vmem:[#allocation6 + $0x90] sm:$0xff]
    %v157 = vld [vmem:[#allocation6 + $0x98] sm:$0xff]
    %v158 = vld [vmem:[#allocation6 + $0xa0] sm:$0xff]
    %v159 = vld [vmem:[#allocation6 + $0xa8] sm:$0xff]
    %v160 = vld [vmem:[#allocation6 + $0xb0] sm:$0xff]
    %v161 = vld [vmem:[#allocation6 + $0xb8] sm:$0xff]
    %v162 = vld [vmem:[#allocation6 + $0xc0] sm:$0xff]
    %v163 = vld [vmem:[#allocation6 + $0xc8] sm:$0xff]
    %v164 = vld [vmem:[#allocation6 + $0xd0] sm:$0xff]
    %v165 = vld [vmem:[#allocation6 + $0xd8] sm:$0xff]
    %v166 = vld [vmem:[#allocation6 + $0xe0] sm:$0xff]
    %v167 = vld [vmem:[#allocation6 + $0xe8] sm:$0xff]
    %v168 = vld [vmem:[#allocation6 + $0xf0] sm:$0xff]
    %v169 = vld [vmem:[#allocation6 + $0xf8] sm:$0xff]
    %v170 = vld [vmem:[%s5] sm:$0x1]
    %v172 = vperm.slane %v170, 0
    %174 = vmatpush.msra.mxu0 %v153
    %175 = vmatpush.msra.mxu0 %v152
    %176 = vmatpush.msra.mxu0 %v151
    %177 = vmatpush.msra.mxu0 %v150
    %178 = vmatpush.msra.mxu0 %v149
    %179 = vmatpush.msra.mxu0 %v148
    %180 = vmatpush.msra.mxu0 %v147
    %181 = vmatpush.msra.mxu0 %v146
    %182 = vmatpush.msra.mxu0 %v145
    %183 = vmatpush.msra.mxu0 %v144
    %184 = vmatpush.msra.mxu0 %v143
    %185 = vmatpush.msra.mxu0 %v142
    %186 = vmatpush.msra.mxu0 %v141
    %187 = vmatpush.msra.mxu0 %v140
    %188 = vmatpush.msra.mxu0 %v139
    %189 = vmatpush.msra.mxu0 %v138
    %190 = vmatmul.f32.gmra.mxu0 %v136
    %v191 = vpop.f32.mrf.mxu0
    %v192 = vadd.f32 %v172, %v191
    %193 = vdwg.mxu0
    %194 = vmatpush.msra.mxu0 %v169
    %195 = vmatpush.msra.mxu0 %v168
    %196 = vmatpush.msra.mxu0 %v167
    %197 = vmatpush.msra.mxu0 %v166
    %198 = vmatpush.msra.mxu0 %v165
    %199 = vmatpush.msra.mxu0 %v164
    %200 = vmatpush.msra.mxu0 %v163
    %201 = vmatpush.msra.mxu0 %v162
    %202 = vmatpush.msra.mxu0 %v161
    %203 = vmatpush.msra.mxu0 %v160
    %204 = vmatpush.msra.mxu0 %v159
    %205 = vmatpush.msra.mxu0 %v158
    %206 = vmatpush.msra.mxu0 %v157
    %207 = vmatpush.msra.mxu0 %v156
    %208 = vmatpush.msra.mxu0 %v155
    %209 = vmatpush.msra.mxu0 %v154
    %210 = vmatmul.f32.gmra.mxu0 %v137
    %v211 = vpop.f32.mrf.mxu0
    %v212 = vadd.f32 %v192, %v211
    %213 = vdwg.mxu0
    %v214 = vmax.f32 %v212, 0.0
    %v215 = vld [vmem:[%s6] sm:$0x1]
    %v217 = vperm.slane %v215, 0
    %v219 = vmul.f32 %v214, %v217
    %220 = vadd.xlane.f32.xlu0 %v219
    %v221 = vpop.xlane.xlu0 %220
    %s222 = sld [smem:[#allocation3]]
    %v223 = vstv %s222
    %v224 = vadd.f32 %v221, %v223
    %vm225 = vcmask 7168
    %226 = vst.msk [vmem:[%s8] sm:$0xff] %vm225, %v224
    // Predicated region
    $region42: #{tpu_custom_call.1} parent=1 // pred_check
      _
    $region43: #{tpu_custom_call.1} parent=1 // pred_check_branch
      %228 = sbr.rel (0) target = $region45
    $region44: #{tpu_custom_call.1} parent=1 // pred_region
      _
    $region45: #{tpu_custom_call.1} parent=1 // pred_fallthru
      _
    // Predicated region
    $region46: #{tpu_custom_call.1} parent=1 // pred_check
      _
    $region47: #{tpu_custom_call.1} parent=1 // pred_check_branch
      %230 = sbr.rel (0) target = $region49
    $region48: #{tpu_custom_call.1} parent=1 // pred_region
      _
    $region49: #{tpu_custom_call.1} parent=1 // pred_fallthru
      _
    %231 = vsyncpa [#allocation5], 1
    %232 = vsyncpa [#allocation7], 1

</llo_original>
